<compile_context>
chip_gen: v5e
topology: v5e:2x2
jax: 0.10.0
libtpu: 0.0.40
codegen_flags: <defaults>
</compile_context>

<pallas_src>
import functools
import math

import jax
import jax.numpy as jnp
from jax.experimental import pallas as pl
from jax.experimental.pallas import tpu as pltpu


def _merge_contiguous(shape, dims):
    """Collapse runs of input axes that stay adjacent & in order under `dims`.

    Returns (merged_input_shape, merged_perm).  Merging is a pure reshape on
    both sides and minimizes the rank of the transpose the kernel must do.
    """
    groups = []  # groups of original input axes, in OUTPUT order
    for d in dims:
        if groups and d == groups[-1][-1] + 1:
            groups[-1].append(d)
        else:
            groups.append([d])
    order = sorted(range(len(groups)), key=lambda gi: groups[gi][0])
    mshape = tuple(int(math.prod(shape[a] for a in groups[gi])) for gi in order)
    pos = {gi: i for i, gi in enumerate(order)}  # group id -> merged input axis
    mperm = tuple(pos[gi] for gi in range(len(groups)))
    return mshape, mperm


_BLOCK_BYTES_BUDGET = 2 * 1024 * 1024  # per block; 2x double-buffered in+out ~8 MiB


def _round_up(x, m):
    return ((x + m - 1) // m) * m


@functools.lru_cache(maxsize=None)
def _build_permute_call(mshape, mperm, dtype):
    r = len(mshape)
    assert r >= 2
    out_mshape = tuple(mshape[p] for p in mperm)
    itemsize = jnp.dtype(dtype).itemsize
    sublane_align = 8 * max(1, 4 // itemsize)   # 8 (f32), 16 (bf16), 32 (int8/fp8)
    lane_align = 128

    # Axes that must be resident inside one block: the input's last two axes
    # plus the input axes that become the output's last two axes.
    f_axes = sorted({r - 2, r - 1, mperm[-2], mperm[-1]})

    def align_of(a):
        if a == r - 1 or a == mperm[-1]:
            return lane_align       # lane dim on input and/or output side
        return sublane_align        # sublane dim only

    # Start from the full (alignment-rounded) dim; padding stays in VMEM only
    # (HBM DMAs copy / mask just the valid region), and it guarantees the
    # in-kernel transpose always sees (8,128)-tiled shapes.
    tiles = {a: _round_up(mshape[a], align_of(a)) for a in f_axes}

    def block_bytes():
        return math.prod(tiles.values()) * itemsize

    # Greedily halve the largest tiled axis until the block fits the budget.
    while block_bytes() > _BLOCK_BYTES_BUDGET:
        shrinkable = [a for a in f_axes if tiles[a] > align_of(a)]
        if not shrinkable:
            break  # TODO(synk): nothing more to shrink; rely on vmem_limit default
        a = max(shrinkable, key=lambda a: tiles[a])
        al = align_of(a)
        tiles[a] = max(al, _round_up(tiles[a] // 2, al))

    in_block = tuple(tiles[a] if a in f_axes else 1 for a in range(r))
    out_block = tuple(in_block[p] for p in mperm)
    grid = tuple(pl.cdiv(mshape[a], in_block[a]) for a in range(r))

    def kernel(x_ref, o_ref):
        # Pure relayout: transpose the resident block (XLU / sublane shuffles).
        o_ref[...] = jnp.transpose(x_ref[...], mperm)

    def in_index_map(*g):
        return g

    def out_index_map(*g):
        return tuple(g[p] for p in mperm)

    nbytes = math.prod(mshape) * itemsize
    return pl.pallas_call(
        kernel,
        out_shape=jax.ShapeDtypeStruct(out_mshape, dtype),
        grid=grid,
        in_specs=[pl.BlockSpec(in_block, in_index_map)],
        out_specs=pl.BlockSpec(out_block, out_index_map),
        compiler_params=pltpu.CompilerParams(
            dimension_semantics=("parallel",) * r,
        ),
        cost_estimate=pl.CostEstimate(
            flops=0, transcendentals=0, bytes_accessed=2 * nbytes
        ),
    )


def permute(x: jax.Array, dims) -> jax.Array:
    """Pallas equivalent of torch.Tensor.permute(*dims)."""
    ndim = x.ndim
    dims = tuple(int(d) % ndim for d in dims)
    if sorted(dims) != list(range(ndim)):
        raise ValueError(f"dims {dims} is not a permutation of range({ndim})")
    out_shape = tuple(x.shape[d] for d in dims)

    mshape, mperm = _merge_contiguous(tuple(int(s) for s in x.shape), dims)
    if len(mperm) <= 1:
        # Identity permutation (possibly after merging runs): pure metadata.
        # (torch returns a view; here this is a free reshape.)
        return x.reshape(out_shape)

    call = _build_permute_call(mshape, mperm, jnp.dtype(x.dtype))
    y_merged = call(x.reshape(mshape))
    return y_merged.reshape(out_shape)


class Permute:
    """Mirror of the PyTorch module: Permute(*dims)(x) == x.permute(*dims)."""

    def __init__(self, *dims: int) -> None:
        self.dims = dims

    def __call__(self, x: jax.Array) -> jax.Array:
        return permute(x, self.dims)


if __name__ == "__main__":
    key = jax.random.PRNGKey(0)
    k1, k2 = jax.random.split(key)

    # NCHW -> NHWC (batch=2, channels=4, 16x16): a typical refiners usage.
    x = jax.random.normal(k1, (2, 4, 16, 16), dtype=jnp.float32)
    layer = Permute(0, 2, 3, 1)
    y = jax.block_until_ready(layer(x))
    ref = jnp.transpose(x, (0, 2, 3, 1))
    assert y.shape == ref.shape and y.dtype == ref.dtype
    assert bool(jnp.array_equal(y, ref))

    # (B, H, L, D) -> (B, L, H, D): attention-style head/sequence swap.
    x2 = jax.random.normal(k2, (2, 4, 8, 32), dtype=jnp.float32)
    y2 = jax.block_until_ready(permute(x2, (0, 2, 1, 3)))
    ref2 = jnp.transpose(x2, (0, 2, 1, 3))
    assert y2.shape == ref2.shape and bool(jnp.array_equal(y2, ref2))

    print("KERNEL_OK")
</pallas_src>

<mosaic_0001>
module attributes {stable_mosaic.version = 11 : i64} {
  func.func @kernel(%arg0: i32, %arg1: i32, %arg2: i32, %arg3: memref<1x128x256xf32, #tpu.memory_space<vmem>>, %arg4: memref<1x256x128xf32, #tpu.memory_space<vmem>>) attributes {dimension_semantics = [#tpu.dimension_semantics<parallel>, #tpu.dimension_semantics<parallel>, #tpu.dimension_semantics<parallel>], iteration_bounds = array<i64: 2, 1, 1>, scalar_prefetch = 0 : i64, scratch_operands = 0 : i64, tpu.core_type = #tpu.core_type<tc>, window_params = [{transform_indices = @transform_0, window_bounds = array<i64: 1, 128, 256>}, {transform_indices = @transform_1, window_bounds = array<i64: 1, 256, 128>}]} {
    %c0 = arith.constant 0 : index
    %c0_0 = arith.constant 0 : index
    %c0_1 = arith.constant 0 : index
    %0 = vector.load %arg3[%c0, %c0_0, %c0_1] : memref<1x128x256xf32, #tpu.memory_space<vmem>>, vector<1x128x256xf32>
    %1 = tpu.transpose %0, [0, 2, 1] : vector<1x128x256xf32> -> vector<1x256x128xf32>
    %c0_2 = arith.constant 0 : index
    %c0_3 = arith.constant 0 : index
    %c0_4 = arith.constant 0 : index
    %2 = vector.load %arg4[%c0_2, %c0_3, %c0_4] : memref<1x256x128xf32, #tpu.memory_space<vmem>>, vector<1x256x128xf32>
    tpu.vector_store %arg4[%c0_2, %c0_3, %c0_4], %1 {strides = array<i32>} : memref<1x256x128xf32, #tpu.memory_space<vmem>>, vector<1x256x128xf32>,
    return
  }
  func.func @transform_0(%arg0: i32, %arg1: i32, %arg2: i32) -> (i32, i32, i32) {
    %c0_i32 = arith.constant 0 : i32
    return %arg0, %arg1, %arg2 : i32, i32, i32
  }
  func.func @transform_1(%arg0: i32, %arg1: i32, %arg2: i32) -> (i32, i32, i32) {
    %c0_i32 = arith.constant 0 : i32
    return %arg0, %arg2, %arg1 : i32, i32, i32
  }
}

</mosaic_0001>

<llo_original>
// kernel: tpu_custom_call.1
$region0: #{tpu_custom_call.1}
  #allocation0 [shape = 'u32[]', space=smem, size = 0x4, offset = 0x4, fixed_abs, tag = 'smem constant byte address 0x4 - core index']
  #allocation1 [shape = 'u32[72,128]{1,0:T(1,128)}', space=vmem, size = 0x9000, scoped, tag = 'internal scratch']
  %s0 = inlined_call_operand.hbm [shape: f32[2,4,256], index: 0, kind: input, shape index: {}]
  %s1 = inlined_call_operand.vmem [shape: f32[2,256,4], index: 1, kind: output, shape index: {}]
  %s2 = sld [smem:[#allocation0]]
  $region41: #{tpu_custom_call.1} parent=0
    _
  %s4 = ssub.s32 1, %s2
  %s5 = scalar_select 0, %s4, %s2
  $region1: #{tpu_custom_call.1} parent=0
    #allocation2 [shape = 'u8[262144]{0}', space=vmem, size = 0x40000, scoped, tag = 'input window, operand 0']
    #allocation3 [shape = 's32[2]{0}', space=sflag, size = 0x8, scoped, tag = 'scoped memory for tpu_custom_call.1']
    %6 = vsyncpa [#allocation3], 0
    %s7 = scalar_lea.sflag [#allocation3], 1
    %8 = vsyncpa %s7, 0
    loop: start=0, step=1, limit=4
    $region2: #{tpu_custom_call.1} parent=1 // loop_pre_header
      _
    $region3: #{tpu_custom_call.1} parent=1 // loop_header
      %s10 = sphi 0, %s14
      %p11 = scmp.ge.s32.totalorder %s10, 4
      %s17 = sphi 0, %s36
      %s18 = sphi 0, %s32
      %s19 = sphi 0, %s28
      %s20 = sphi 0, %s17
      %s21 = sphi 0, %s18
      %s22 = sphi 0, %s19
      %s23 = sphi 0, %s20
      %s24 = sphi 0, %s21
      %s25 = sphi 0, %s22
      %s43 = sphi 0, %s45
      %s46 = sphi 0, %s43
      %s47 = sphi 0, %s46
      %s63 = sphi 0, %s47
      %s73 = sphi 0, %s75
      %s76 = sphi 0, %s73
      %s77 = sphi 0, %s76
      %s93 = sphi 0, %s77
    $region4: #{tpu_custom_call.1} parent=1 // loop_header_branch
      %13 = sbr.rel (%p11) target = $region8
    $region5: #{tpu_custom_call.1} parent=1 // loop_body
      %s15 = ssub.s32 %s10, 1
      %s16 = ssub.s32 %s10, 2
      %s26 = sadd.s32 1, %s19
      %p27 = scmp.ge.s32.totalorder %s26, 1
      %s28 = scalar_select %p27, 0, %s26
      %s29 = sadd.s32 1, %s18
      %s30 = scalar_select %p27, %s29, %s18
      %p31 = scmp.ge.s32.totalorder %s30, 1
      %s32 = scalar_select %p31, 0, %s30
      %s33 = sadd.s32 1, %s17
      %s34 = scalar_select %p31, %s33, %s17
      %p35 = scmp.ge.s32.totalorder %s34, 2
      %s36 = scalar_select %p35, 0, %s34
      %s37 = ssub.s32 %s17, %s36
      %s38 = ssub.s32 %s18, %s32
      %s39 = sor.u32 %s37, %s38
      %s40 = ssub.s32 %s19, %s28
      %s41 = sor.u32 %s39, %s40
      %p42 = scmp.eq.s32.totalorder %s41, 0
      %s44 = sadd.s32 %s43, 1
      %s45 = scalar_select %p42, %s43, %s44
      %p48 = pneg %p42
      %p49 = scmp.eq.s32.totalorder %s10, 1
      %p50 = por %p48, %p49
      %p51 = scmp.ne.s32.totalorder %s43, %s46
      %p52 = scmp.eq.s32.totalorder %s10, 0
      %p53 = por %p51, %p52
      %p54 = scmp.ne.s32.totalorder %s43, %s46
      %p55 = scmp.eq.s32.totalorder %s15, 1
      %p56 = por %p54, %p55
      %p57 = scmp.ne.s32.totalorder %s46, %s47
      %p58 = scmp.eq.s32.totalorder %s15, 0
      %p59 = por %p57, %p58
      %p60 = scmp.ne.s32.totalorder %s46, %s47
      %p61 = scmp.eq.s32.totalorder %s16, 1
      %p62 = por %p60, %p61
      %p64 = scmp.ne.s32.totalorder %s47, %s63
      %p65 = scmp.eq.s32.totalorder %s16, 0
      %p66 = por %p64, %p65
      %s67 = ssub.s32 %s17, %s36
      %s68 = ssub.s32 %s19, %s28
      %s69 = sor.u32 %s67, %s68
      %s70 = ssub.s32 %s18, %s32
      %s71 = sor.u32 %s69, %s70
      %p72 = scmp.eq.s32.totalorder %s71, 0
      %s74 = sadd.s32 %s73, 1
      %s75 = scalar_select %p72, %s73, %s74
      %p78 = pneg %p72
      %p79 = scmp.eq.s32.totalorder %s10, 1
      %p80 = por %p78, %p79
      %p81 = scmp.ne.s32.totalorder %s73, %s76
      %p82 = scmp.eq.s32.totalorder %s10, 0
      %p83 = por %p81, %p82
      %p84 = scmp.ne.s32.totalorder %s73, %s76
      %p85 = scmp.eq.s32.totalorder %s15, 1
      %p86 = por %p84, %p85
      %p87 = scmp.ne.s32.totalorder %s76, %s77
      %p88 = scmp.eq.s32.totalorder %s15, 0
      %p89 = por %p87, %p88
      %p90 = scmp.ne.s32.totalorder %s76, %s77
      %p91 = scmp.eq.s32.totalorder %s16, 1
      %p92 = por %p90, %p91
      %p94 = scmp.ne.s32.totalorder %s77, %s93
      %p95 = scmp.eq.s32.totalorder %s16, 0
      %p96 = por %p94, %p95
      %p97 = scmp.le.s32.totalorder 1, %s10
      %p98 = scmp.lt.s32.totalorder %s10, 3
      %p99 = pnand %p97, %p98
      %p100 = pneg %p99
      // Predicated region
      $region9: #{tpu_custom_call.1} parent=5 // pred_check
        _
      $region10: #{tpu_custom_call.1} parent=5 // pred_check_branch
        %102 = sbr.rel (%p99) target = $region12
      $region11: #{tpu_custom_call.1} parent=5 // pred_region
        %s103 = ssub.s32 %s10, 1
      $region12: #{tpu_custom_call.1} parent=5 // pred_fallthru
        _
      %p104 = scmp.lt.s32.totalorder %s10, 2
      // Predicated region
      $region13: #{tpu_custom_call.1} parent=5 // pred_check
        %p105 = pneg %p104
      $region14: #{tpu_custom_call.1} parent=5 // pred_check_branch
        %107 = sbr.rel (%p105) target = $region16
      $region15: #{tpu_custom_call.1} parent=5 // pred_region
        // Predicated region
        $region17: #{tpu_custom_call.1} parent=15 // pred_check
          %p108 = pneg %p53
        $region18: #{tpu_custom_call.1} parent=15 // pred_check_branch
          %110 = sbr.rel (%p108) target = $region20
        $region19: #{tpu_custom_call.1} parent=15 // pred_region
          %s111 = sand.u32 %s43, 1
          %s112 = scalar_lea.sflag [#allocation3], %s111
          %s113 = sand.u32 %s43, 1
          %s114 = smul.addr %s113, 256
          %s115 = scalar_lea.vmem [#allocation2], %s114
          %s116 = smul.u32 32, %s18
          %s117 = smul.u32 2, %s19
          %s118 = ssub.s32 1, %s116
          %s119 = smul.u32 4, %s118
          %s120 = smul.u32 %s119, 2
          %s121 = ssub.s32 256, %s120
          %s122 = sshll.u32 %s121, 4
          %123 = vsyncadd %s112, %s122
          %p124 = scmp.ne.s32.totalorder 0, %s120
          %s125 = smul.addr %s116, 2
          %s126 = sadd.s32 %s117, %s125
          %s127 = smul.addr %s17, 2
          %s128 = sadd.s32 %s126, %s127
          %s129 = smul.addr %s128, 4
          %s130 = scalar_lea.hbm %s0, %s129
          %s131 = smul.u32 8, %s118
          %s132 = sshll.u32 %s130, 4
          %s133 = int_to_ptr.hbm [resolvable:$true] %s132
          %s134 = sshll.u32 %s115, 4
          %s135 = int_to_ptr.vmem [resolvable:$true] %s134
          %s136 = sshll.u32 %s131, 4
          %140 = dma.hbm_to_vmem [thread:$0]  (%p124), %s133, %s136, %s135, %s112, 128, 128, 8
        $region20: #{tpu_custom_call.1} parent=15 // pred_fallthru
          _
      $region16: #{tpu_custom_call.1} parent=5 // pred_fallthru
        _
      %p141 = scmp.le.s32.totalorder 1, %s10
      %p142 = scmp.lt.s32.totalorder %s10, 3
      %p143 = pnand %p141, %p142
      %p144 = pneg %p143
      // Predicated region
      $region21: #{tpu_custom_call.1} parent=5 // pred_check
        _
      $region22: #{tpu_custom_call.1} parent=5 // pred_check_branch
        %146 = sbr.rel (%p143) target = $region24
      $region23: #{tpu_custom_call.1} parent=5 // pred_region
        %s147 = ssub.s32 %s10, 1
        %s148 = sand.u32 %s46, 1
        %s149 = scalar_lea.sflag [#allocation3], %s148
        %s150 = sand.u32 %s46, 1
        %s151 = smul.addr %s150, 256
        %s152 = scalar_lea.vmem [#allocation2], %s151
        // Predicated region
        $region25: #{tpu_custom_call.1} parent=23 // pred_check
          %p153 = pneg %p59
        $region26: #{tpu_custom_call.1} parent=23 // pred_check_branch
          %155 = sbr.rel (%p153) target = $region28
        $region27: #{tpu_custom_call.1} parent=23 // pred_region
          %157 = dma.done %s149, 4096
        $region28: #{tpu_custom_call.1} parent=23 // pred_fallthru
          _
        %s158 = sand.u32 %s46, 1
        %s159 = scalar_lea.sflag [#allocation3], %s158
        %s160 = sand.u32 %s46, 1
        %s161 = smul.addr %s160, 256
        %s162 = scalar_lea.vmem [#allocation2], %s161
        %p163 = pneg %p59
        %p164 = pneg %p56
        %p165 = pneg %p89
        %p166 = pneg %p86
        %s167 = smul.u32 32, %s22
        %p168 = scmp.lt.s32.totalorder %s20, 1
        %s169 = scalar_select %p168, %s20, 1
        %p170 = scmp.lt.s32.totalorder %s167, 31
        %s171 = scalar_select %p170, %s167, 31
        %p172 = scmp.lt.s32.totalorder %s21, 0
        %s173 = scalar_select %p172, %s21, 0
        %s174 = sadd.s32 %s173, %s171
        %s175 = smul.addr %s169, 32
        %s176 = sadd.s32 %s174, %s175
        %s177 = smul.addr %s176, 8
        %s178 = scalar_lea.vmem %s1, %s177
        %s179 = smul.u32 32, %s21
        %s180 = smul.u32 2, %s22
        %s181 = ssub.s32 1, %s179
        %s182 = smul.u32 4, %s181
        %s183 = smul.u32 %s182, 2
        %s184 = smul.u32 32, %s22
        %p185 = scmp.lt.s32.totalorder %s20, 1
        %s186 = scalar_select %p185, %s20, 1
        %p187 = scmp.lt.s32.totalorder %s184, 31
        %s188 = scalar_select %p187, %s184, 31
        %p189 = scmp.lt.s32.totalorder %s21, 0
        %s190 = scalar_select %p189, %s21, 0
        %s191 = sadd.s32 %s190, %s188
        %s192 = smul.addr %s186, 32
        %s193 = sadd.s32 %s191, %s192
        %s194 = smul.addr %s193, 8
        %s195 = scalar_lea.vmem %s1, %s194
        %s196 = smul.u32 32, %s22
        %v197 = vld [vmem:[%s152] sm:$0xff]
        %v198 = vld [vmem:[%s152 + $0x8] sm:$0xff]
        %v199 = vld [vmem:[%s152 + $0x10] sm:$0xff]
        %v200 = vld [vmem:[%s152 + $0x18] sm:$0xff]
        %v201 = vld [vmem:[%s152 + $0x20] sm:$0xff]
        %v202 = vld [vmem:[%s152 + $0x28] sm:$0xff]
        %v203 = vld [vmem:[%s152 + $0x30] sm:$0xff]
        %v204 = vld [vmem:[%s152 + $0x38] sm:$0xff]
        %v205 = vld [vmem:[%s152 + $0x40] sm:$0xff]
        %v206 = vld [vmem:[%s152 + $0x48] sm:$0xff]
        %v207 = vld [vmem:[%s152 + $0x50] sm:$0xff]
        %v208 = vld [vmem:[%s152 + $0x58] sm:$0xff]
        %v209 = vld [vmem:[%s152 + $0x60] sm:$0xff]
        %v210 = vld [vmem:[%s152 + $0x68] sm:$0xff]
        %v211 = vld [vmem:[%s152 + $0x70] sm:$0xff]
        %v212 = vld [vmem:[%s152 + $0x78] sm:$0xff]
        %v213 = vld [vmem:[%s152 + $0x80] sm:$0xff]
        %v214 = vld [vmem:[%s152 + $0x88] sm:$0xff]
        %v215 = vld [vmem:[%s152 + $0x90] sm:$0xff]
        %v216 = vld [vmem:[%s152 + $0x98] sm:$0xff]
        %v217 = vld [vmem:[%s152 + $0xa0] sm:$0xff]
        %v218 = vld [vmem:[%s152 + $0xa8] sm:$0xff]
        %v219 = vld [vmem:[%s152 + $0xb0] sm:$0xff]
        %v220 = vld [vmem:[%s152 + $0xb8] sm:$0xff]
        %v221 = vld [vmem:[%s152 + $0xc0] sm:$0xff]
        %v222 = vld [vmem:[%s152 + $0xc8] sm:$0xff]
        %v223 = vld [vmem:[%s152 + $0xd0] sm:$0xff]
        %v224 = vld [vmem:[%s152 + $0xd8] sm:$0xff]
        %v225 = vld [vmem:[%s152 + $0xe0] sm:$0xff]
        %v226 = vld [vmem:[%s152 + $0xe8] sm:$0xff]
        %v227 = vld [vmem:[%s152 + $0xf0] sm:$0xff]
        %v228 = vld [vmem:[%s152 + $0xf8] sm:$0xff]
        %261 = vst [vmem:[#allocation1] ss:$2 sm:$0xff] %v197
        %s262 = scalar_lea.vmem [#allocation1], 1
        %263 = vst [vmem:[%s262] ss:$2 sm:$0xff] %v198
        %s264 = scalar_lea.vmem [#allocation1], 16
        %265 = vst [vmem:[%s264] ss:$2 sm:$0xff] %v199
        %s266 = scalar_lea.vmem [#allocation1], 17
        %267 = vst [vmem:[%s266] ss:$2 sm:$0xff] %v200
        %s268 = scalar_lea.vmem [#allocation1], 32
        %269 = vst [vmem:[%s268] ss:$2 sm:$0xff] %v201
        %s270 = scalar_lea.vmem [#allocation1], 33
        %271 = vst [vmem:[%s270] ss:$2 sm:$0xff] %v202
        %s272 = scalar_lea.vmem [#allocation1], 48
        %273 = vst [vmem:[%s272] ss:$2 sm:$0xff] %v203
        %s274 = scalar_lea.vmem [#allocation1], 49
        %275 = vst [vmem:[%s274] ss:$2 sm:$0xff] %v204
        %v276 = vld.sshfl [vmem:[#allocation1] sm:$0xff pattern:$0x75316420]
        %v277 = vld.sshfl [vmem:[#allocation1 + $0x8] sm:$0xff pattern:$0x75316420]
        %v278 = vld.sshfl [vmem:[#allocation1 + $0x10] sm:$0xff pattern:$0x75316420]
        %v279 = vld.sshfl [vmem:[#allocation1 + $0x18] sm:$0xff pattern:$0x75316420]
        %v280 = vld.sshfl [vmem:[#allocation1 + $0x20] sm:$0xff pattern:$0x75316420]
        %v281 = vld.sshfl [vmem:[#allocation1 + $0x28] sm:$0xff pattern:$0x75316420]
        %v282 = vld.sshfl [vmem:[#allocation1 + $0x30] sm:$0xff pattern:$0x75316420]
        %v283 = vld.sshfl [vmem:[#allocation1 + $0x38] sm:$0xff pattern:$0x75316420]
        %284 = vst [vmem:[#allocation1] ss:$2 sm:$0xff] %v205
        %285 = vst [vmem:[%s262] ss:$2 sm:$0xff] %v206
        %286 = vst [vmem:[%s264] ss:$2 sm:$0xff] %v207
        %287 = vst [vmem:[%s266] ss:$2 sm:$0xff] %v208
        %288 = vst [vmem:[%s268] ss:$2 sm:$0xff] %v209
        %289 = vst [vmem:[%s270] ss:$2 sm:$0xff] %v210
        %290 = vst [vmem:[%s272] ss:$2 sm:$0xff] %v211
        %291 = vst [vmem:[%s274] ss:$2 sm:$0xff] %v212
        %v292 = vld.sshfl [vmem:[#allocation1] sm:$0xff pattern:$0x75316420]
        %v293 = vld.sshfl [vmem:[#allocation1 + $0x8] sm:$0xff pattern:$0x75316420]
        %v294 = vld.sshfl [vmem:[#allocation1 + $0x10] sm:$0xff pattern:$0x75316420]
        %v295 = vld.sshfl [vmem:[#allocation1 + $0x18] sm:$0xff pattern:$0x75316420]
        %v296 = vld.sshfl [vmem:[#allocation1 + $0x20] sm:$0xff pattern:$0x75316420]
        %v297 = vld.sshfl [vmem:[#allocation1 + $0x28] sm:$0xff pattern:$0x75316420]
        %v298 = vld.sshfl [vmem:[#allocation1 + $0x30] sm:$0xff pattern:$0x75316420]
        %v299 = vld.sshfl [vmem:[#allocation1 + $0x38] sm:$0xff pattern:$0x75316420]
        %300 = vst [vmem:[#allocation1] ss:$2 sm:$0xff] %v213
        %301 = vst [vmem:[%s262] ss:$2 sm:$0xff] %v214
        %302 = vst [vmem:[%s264] ss:$2 sm:$0xff] %v215
        %303 = vst [vmem:[%s266] ss:$2 sm:$0xff] %v216
        %304 = vst [vmem:[%s268] ss:$2 sm:$0xff] %v217
        %305 = vst [vmem:[%s270] ss:$2 sm:$0xff] %v218
        %306 = vst [vmem:[%s272] ss:$2 sm:$0xff] %v219
        %307 = vst [vmem:[%s274] ss:$2 sm:$0xff] %v220
        %v308 = vld.sshfl [vmem:[#allocation1] sm:$0xff pattern:$0x75316420]
        %v309 = vld.sshfl [vmem:[#allocation1 + $0x8] sm:$0xff pattern:$0x75316420]
        %v310 = vld.sshfl [vmem:[#allocation1 + $0x10] sm:$0xff pattern:$0x75316420]
        %v311 = vld.sshfl [vmem:[#allocation1 + $0x18] sm:$0xff pattern:$0x75316420]
        %v312 = vld.sshfl [vmem:[#allocation1 + $0x20] sm:$0xff pattern:$0x75316420]
        %v313 = vld.sshfl [vmem:[#allocation1 + $0x28] sm:$0xff pattern:$0x75316420]
        %v314 = vld.sshfl [vmem:[#allocation1 + $0x30] sm:$0xff pattern:$0x75316420]
        %v315 = vld.sshfl [vmem:[#allocation1 + $0x38] sm:$0xff pattern:$0x75316420]
        %316 = vst [vmem:[#allocation1] ss:$2 sm:$0xff] %v221
        %317 = vst [vmem:[%s262] ss:$2 sm:$0xff] %v222
        %318 = vst [vmem:[%s264] ss:$2 sm:$0xff] %v223
        %319 = vst [vmem:[%s266] ss:$2 sm:$0xff] %v224
        %320 = vst [vmem:[%s268] ss:$2 sm:$0xff] %v225
        %321 = vst [vmem:[%s270] ss:$2 sm:$0xff] %v226
        %322 = vst [vmem:[%s272] ss:$2 sm:$0xff] %v227
        %323 = vst [vmem:[%s274] ss:$2 sm:$0xff] %v228
        %v324 = vld.sshfl [vmem:[#allocation1] sm:$0xff pattern:$0x75316420]
        %v325 = vld.sshfl [vmem:[#allocation1 + $0x8] sm:$0xff pattern:$0x75316420]
        %v326 = vld.sshfl [vmem:[#allocation1 + $0x10] sm:$0xff pattern:$0x75316420]
        %v327 = vld.sshfl [vmem:[#allocation1 + $0x18] sm:$0xff pattern:$0x75316420]
        %v328 = vld.sshfl [vmem:[#allocation1 + $0x20] sm:$0xff pattern:$0x75316420]
        %v329 = vld.sshfl [vmem:[#allocation1 + $0x28] sm:$0xff pattern:$0x75316420]
        %v330 = vld.sshfl [vmem:[#allocation1 + $0x30] sm:$0xff pattern:$0x75316420]
        %v331 = vld.sshfl [vmem:[#allocation1 + $0x38] sm:$0xff pattern:$0x75316420]
        %364 = vxpose.xlu0.b32.start [1/16] %v276, 128
        %365 = vxpose.xlu0.b32.cont [2/16] %v278, 128
        %366 = vxpose.xlu0.b32.cont [3/16] %v280, 128
        %367 = vxpose.xlu0.b32.cont [4/16] %v282, 128
        %368 = vxpose.xlu0.b32.cont [5/16] %v292, 128
        %369 = vxpose.xlu0.b32.cont [6/16] %v294, 128
        %370 = vxpose.xlu0.b32.cont [7/16] %v296, 128
        %371 = vxpose.xlu0.b32.cont [8/16] %v298, 128
        %372 = vxpose.xlu0.b32.cont [9/16] %v308, 128
        %373 = vxpose.xlu0.b32.cont [10/16] %v310, 128
        %374 = vxpose.xlu0.b32.cont [11/16] %v312, 128
        %375 = vxpose.xlu0.b32.cont [12/16] %v314, 128
        %376 = vxpose.xlu0.b32.cont [13/16] %v324, 128
        %377 = vxpose.xlu0.b32.cont [14/16] %v326, 128
        %378 = vxpose.xlu0.b32.cont [15/16] %v328, 128
        %379 = vxpose.xlu0.b32.end [16/16] %v330, 128
        %v380 = vpop.trf.xlu0
        %v381 = vpop.trf.xlu0
        %v382 = vpop.trf.xlu0
        %v383 = vpop.trf.xlu0
        %v384 = vpop.trf.xlu0
        %v385 = vpop.trf.xlu0
        %v386 = vpop.trf.xlu0
        %v387 = vpop.trf.xlu0
        %v388 = vpop.trf.xlu0
        %v389 = vpop.trf.xlu0
        %v390 = vpop.trf.xlu0
        %v391 = vpop.trf.xlu0
        %v392 = vpop.trf.xlu0
        %v393 = vpop.trf.xlu0
        %v394 = vpop.trf.xlu0
        %v395 = vpop.trf.xlu0
        %396 = vxpose.xlu0.b32.start [1/16] %v277, 128
        %397 = vxpose.xlu0.b32.cont [2/16] %v279, 128
        %398 = vxpose.xlu0.b32.cont [3/16] %v281, 128
        %399 = vxpose.xlu0.b32.cont [4/16] %v283, 128
        %400 = vxpose.xlu0.b32.cont [5/16] %v293, 128
        %401 = vxpose.xlu0.b32.cont [6/16] %v295, 128
        %402 = vxpose.xlu0.b32.cont [7/16] %v297, 128
        %403 = vxpose.xlu0.b32.cont [8/16] %v299, 128
        %404 = vxpose.xlu0.b32.cont [9/16] %v309, 128
        %405 = vxpose.xlu0.b32.cont [10/16] %v311, 128
        %406 = vxpose.xlu0.b32.cont [11/16] %v313, 128
        %407 = vxpose.xlu0.b32.cont [12/16] %v315, 128
        %408 = vxpose.xlu0.b32.cont [13/16] %v325, 128
        %409 = vxpose.xlu0.b32.cont [14/16] %v327, 128
        %410 = vxpose.xlu0.b32.cont [15/16] %v329, 128
        %411 = vxpose.xlu0.b32.end [16/16] %v331, 128
        %v412 = vpop.trf.xlu0
        %v413 = vpop.trf.xlu0
        %v414 = vpop.trf.xlu0
        %v415 = vpop.trf.xlu0
        %v416 = vpop.trf.xlu0
        %v417 = vpop.trf.xlu0
        %v418 = vpop.trf.xlu0
        %v419 = vpop.trf.xlu0
        %v420 = vpop.trf.xlu0
        %v421 = vpop.trf.xlu0
        %v422 = vpop.trf.xlu0
        %v423 = vpop.trf.xlu0
        %v424 = vpop.trf.xlu0
        %v425 = vpop.trf.xlu0
        %v426 = vpop.trf.xlu0
        %v427 = vpop.trf.xlu0
        %428 = vst [vmem:[%s195] sm:$0xff] %v380
        %429 = vst [vmem:[%s195 + $0x8] sm:$0xff] %v381
        %430 = vst [vmem:[%s195 + $0x10] sm:$0xff] %v382
        %431 = vst [vmem:[%s195 + $0x18] sm:$0xff] %v383
        %432 = vst [vmem:[%s195 + $0x20] sm:$0xff] %v384
        %433 = vst [vmem:[%s195 + $0x28] sm:$0xff] %v385
        %434 = vst [vmem:[%s195 + $0x30] sm:$0xff] %v386
        %435 = vst [vmem:[%s195 + $0x38] sm:$0xff] %v387
        %436 = vst [vmem:[%s195 + $0x40] sm:$0xff] %v388
        %437 = vst [vmem:[%s195 + $0x48] sm:$0xff] %v389
        %438 = vst [vmem:[%s195 + $0x50] sm:$0xff] %v390
        %439 = vst [vmem:[%s195 + $0x58] sm:$0xff] %v391
        %440 = vst [vmem:[%s195 + $0x60] sm:$0xff] %v392
        %441 = vst [vmem:[%s195 + $0x68] sm:$0xff] %v393
        %442 = vst [vmem:[%s195 + $0x70] sm:$0xff] %v394
        %443 = vst [vmem:[%s195 + $0x78] sm:$0xff] %v395
        %444 = vst [vmem:[%s195 + $0x80] sm:$0xff] %v412
        %445 = vst [vmem:[%s195 + $0x88] sm:$0xff] %v413
        %446 = vst [vmem:[%s195 + $0x90] sm:$0xff] %v414
        %447 = vst [vmem:[%s195 + $0x98] sm:$0xff] %v415
        %448 = vst [vmem:[%s195 + $0xa0] sm:$0xff] %v416
        %449 = vst [vmem:[%s195 + $0xa8] sm:$0xff] %v417
        %450 = vst [vmem:[%s195 + $0xb0] sm:$0xff] %v418
        %451 = vst [vmem:[%s195 + $0xb8] sm:$0xff] %v419
        %452 = vst [vmem:[%s195 + $0xc0] sm:$0xff] %v420
        %453 = vst [vmem:[%s195 + $0xc8] sm:$0xff] %v421
        %454 = vst [vmem:[%s195 + $0xd0] sm:$0xff] %v422
        %455 = vst [vmem:[%s195 + $0xd8] sm:$0xff] %v423
        %456 = vst [vmem:[%s195 + $0xe0] sm:$0xff] %v424
        %457 = vst [vmem:[%s195 + $0xe8] sm:$0xff] %v425
        %458 = vst [vmem:[%s195 + $0xf0] sm:$0xff] %v426
        %459 = vst [vmem:[%s195 + $0xf8] sm:$0xff] %v427
        %s460 = smul.u32 32, %s22
        %p461 = scmp.lt.s32.totalorder %s20, 1
        %s462 = scalar_select %p461, %s20, 1
        %p463 = scmp.lt.s32.totalorder %s460, 31
        %s464 = scalar_select %p463, %s460, 31
        %p465 = scmp.lt.s32.totalorder %s21, 0
        %s466 = scalar_select %p465, %s21, 0
        %s467 = sadd.s32 %s466, %s464
        %s468 = smul.addr %s462, 32
        %s469 = sadd.s32 %s467, %s468
        %s470 = smul.addr %s469, 8
        %s471 = scalar_lea.vmem %s1, %s470
        // Predicated region
        $region29: #{tpu_custom_call.1} parent=23 // pred_check
          %p472 = pneg %p86
        $region30: #{tpu_custom_call.1} parent=23 // pred_check_branch
          %474 = sbr.rel (%p472) target = $region32
        $region31: #{tpu_custom_call.1} parent=23 // pred_region
          %s475 = smul.u32 32, %s22
        $region32: #{tpu_custom_call.1} parent=23 // pred_fallthru
          _
      $region24: #{tpu_custom_call.1} parent=5 // pred_fallthru
        _
      %p476 = scmp.le.s32.totalorder 2, %s10
      // Predicated region
      $region33: #{tpu_custom_call.1} parent=5 // pred_check
        %p477 = pneg %p476
      $region34: #{tpu_custom_call.1} parent=5 // pred_check_branch
        %479 = sbr.rel (%p477) target = $region36
      $region35: #{tpu_custom_call.1} parent=5 // pred_region
        %s480 = ssub.s32 %s10, 2
        // Predicated region
        $region37: #{tpu_custom_call.1} parent=35 // pred_check
          %p481 = pneg %p92
        $region38: #{tpu_custom_call.1} parent=35 // pred_check_branch
          %483 = sbr.rel (%p481) target = $region40
        $region39: #{tpu_custom_call.1} parent=35 // pred_region
          %s484 = smul.u32 32, %s25
          %p485 = scmp.lt.s32.totalorder %s23, 1
          %s486 = scalar_select %p485, %s23, 1
          %p487 = scmp.lt.s32.totalorder %s484, 31
          %s488 = scalar_select %p487, %s484, 31
          %p489 = scmp.lt.s32.totalorder %s24, 0
          %s490 = scalar_select %p489, %s24, 0
          %s491 = sadd.s32 %s490, %s488
          %s492 = smul.addr %s486, 32
          %s493 = sadd.s32 %s491, %s492
          %s494 = smul.addr %s493, 8
          %s495 = scalar_lea.vmem %s1, %s494
        $region40: #{tpu_custom_call.1} parent=35 // pred_fallthru
          _
      $region36: #{tpu_custom_call.1} parent=5 // pred_fallthru
        _
    $region6: #{tpu_custom_call.1} parent=1 // loop_footer
      %s14 = sadd.s32 1, %s10
    $region7: #{tpu_custom_call.1} parent=1 // loop_footer_branch
      %9 = sbr.rel target = $region3
    $region8: #{tpu_custom_call.1} parent=1 // loop_exit
      _
    %496 = vsyncpa [#allocation3], 1
    %s497 = scalar_lea.sflag [#allocation3], 1
    %498 = vsyncpa %s497, 1

</llo_original>
